<compile_context>
chip_gen: v5e
topology: v5e:2x2
jax: 0.10.0
libtpu: 0.0.40
codegen_flags: <defaults>
</compile_context>

<pallas_src>
import functools

import jax
import jax.numpy as jnp
import numpy as np
from jax.experimental import pallas as pl
from jax.experimental.pallas import tpu as pltpu


def _round_up(n, m):
    return ((n + m - 1) // m) * m


def _choose_row_tile(n, d, itemsize, *, max_tile=2048, vmem_budget=8 << 20):
    """Pick a row-tile size: as big as the VMEM budget allows, sublane-aligned,
    and small enough that the grid has >= 2 steps (so v7x can use both TCs)."""
    align = 8 * max(1, 4 // itemsize)           # f32: 8, bf16: 16, 8-bit: 32
    per_row_bytes = d * itemsize * 4            # in + out tiles, double-buffered
    tile = (vmem_budget // max(per_row_bytes, 1)) // align * align
    tile = max(align, min(max_tile, tile))
    if n > align:                               # keep >= 2 grid steps when possible
        tile = min(tile, _round_up(-(-n // 2), align))
    tile = min(tile, _round_up(n, align))
    return max(tile, align)


def _layernorm_kernel(x_ref, a2_ref, b2_ref, o_ref, *, eps):
    # x_ref : (TILE, D) row tile of activations
    # a2_ref: (1, D)    f32 gain        (tiny, resident across the grid)
    # b2_ref: (1, D)    f32 bias
    # o_ref : (TILE, D)
    x = x_ref[...].astype(jnp.float32)
    d = x.shape[-1]
    mean = jnp.mean(x, axis=-1, keepdims=True)
    xc = x - mean
    # torch.Tensor.std is the *unbiased* estimator (divide by D-1); the reference
    # module adds eps to the std (not to the variance).
    std = jnp.sqrt(jnp.sum(xc * xc, axis=-1, keepdims=True) / (d - 1))
    # (TILE, 1) exact reciprocal (approx=True's ~2^-12 error could exceed 1e-5 tol).
    inv = pl.reciprocal(std + eps, approx=False)
    o_ref[...] = (xc * inv * a2_ref[...] + b2_ref[...]).astype(o_ref.dtype)


def layernorm_pallas(x, a2, b2, *, eps=1e-6, max_row_tile=2048):
    """PyTorch-style LayerNorm: a2 * (x - mean) / (std_unbiased + eps) + b2."""
    orig_shape = x.shape
    D = orig_shape[-1]
    n = int(np.prod(orig_shape[:-1]))
    x2 = x.reshape(n, D)

    itemsize = jnp.dtype(x.dtype).itemsize
    tile = _choose_row_tile(n, D, itemsize, max_tile=max_row_tile)

    a2_row = a2.reshape(1, D).astype(jnp.float32)
    b2_row = b2.reshape(1, D).astype(jnp.float32)

    out = pl.pallas_call(
        functools.partial(_layernorm_kernel, eps=eps),
        out_shape=jax.ShapeDtypeStruct((n, D), x.dtype),
        grid=(pl.cdiv(n, tile),),               # ragged last block handled by Pallas
        in_specs=[
            pl.BlockSpec((tile, D), lambda i: (i, 0)),   # activation row tile
            pl.BlockSpec((1, D), lambda i: (0, 0)),      # gain  (tiny, resident)
            pl.BlockSpec((1, D), lambda i: (0, 0)),      # bias  (tiny, resident)
        ],
        out_specs=pl.BlockSpec((tile, D), lambda i: (i, 0)),
        compiler_params=pltpu.CompilerParams(
            dimension_semantics=("parallel",),
            vmem_limit_bytes=32 << 20),
    )(x2, a2_row, b2_row)

    return out.reshape(orig_shape)


def decoder_forward(x, m, source_mask, target_mask, layers, norm_a2, norm_b2,
                    *, eps=1e-6):
    """Decoder.forward: run the cloned layers, then the final LayerNorm."""
    # TODO(synk): the DecoderLayer passed to Decoder(layer, N) is not defined in the
    # spec, so per-layer bodies stay caller-supplied JAX callables; fusing the final
    # LayerNorm into the last layer's tail (to save one HBM read) needs that body.
    for layer in layers:
        x = layer(x, m, source_mask, target_mask)
    return layernorm_pallas(x, norm_a2, norm_b2, eps=eps)


if __name__ == "__main__":
    # Small shapes consistent with the module: batch=2, seq=8, d_model=128
    # (lane-dense last dim), N=2 cloned layers.
    batch, seq, d_model, n_layers = 2, 8, 128, 2
    eps = 1e-6

    key = jax.random.PRNGKey(0)
    kx, km, ks, kt, *kw = jax.random.split(key, 4 + n_layers)

    x = jax.random.normal(kx, (batch, seq, d_model), dtype=jnp.float32)
    m = jax.random.normal(km, (batch, seq, d_model), dtype=jnp.float32)
    source_mask = jax.random.bernoulli(ks, 0.9, (batch, seq, 1))
    target_mask = jax.random.bernoulli(kt, 0.9, (batch, seq, 1))

    # LayerNorm parameters, same init as the module (ones / zeros).
    a2 = jnp.ones((d_model,), jnp.float32)
    b2 = jnp.zeros((d_model,), jnp.float32)

    # Deterministic stand-in layers with the DecoderLayer call signature
    # (the real DecoderLayer is not part of the spec).
    def make_stub_layer(k):
        w = jax.random.normal(k, (d_model, d_model), jnp.float32) / np.sqrt(d_model)

        def layer(x, m, source_mask, target_mask):
            self_path = jnp.where(target_mask, x, 0.0)
            cross_path = jnp.where(source_mask, m, 0.0)
            return x + jnp.tanh((self_path + cross_path) @ w)

        return layer

    layers = [make_stub_layer(k) for k in kw]

    out = decoder_forward(x, m, source_mask, target_mask, layers, a2, b2, eps=eps)
    out = jax.block_until_ready(out)

    # Reference: identical layer stack + PyTorch-formula LayerNorm in plain JAX.
    ref = x
    for layer in layers:
        ref = layer(ref, m, source_mask, target_mask)
    mean = ref.mean(-1, keepdims=True)
    xc = ref - mean
    std = jnp.sqrt(jnp.sum(xc * xc, axis=-1, keepdims=True) / (d_model - 1))
    ref = a2 * xc / (std + eps) + b2

    np.testing.assert_allclose(np.asarray(out), np.asarray(ref),
                               rtol=1e-5, atol=1e-5)
    assert out.shape == (batch, seq, d_model)
    assert out.dtype == jnp.float32

    print("KERNEL_OK")
</pallas_src>

<mosaic_0001>
module attributes {stable_mosaic.version = 11 : i64} {
  func.func @_layernorm_kernel(%arg0: i32, %arg1: memref<8x128xf32, #tpu.memory_space<vmem>>, %arg2: memref<1x128xf32, #tpu.memory_space<vmem>>, %arg3: memref<1x128xf32, #tpu.memory_space<vmem>>, %arg4: memref<8x128xf32, #tpu.memory_space<vmem>>) attributes {dimension_semantics = [#tpu.dimension_semantics<parallel>], iteration_bounds = array<i64: 2>, scalar_prefetch = 0 : i64, scratch_operands = 0 : i64, tpu.core_type = #tpu.core_type<tc>, window_params = [{transform_indices = @transform_0, window_bounds = array<i64: 8, 128>}, {pipeline_mode = #tpu.pipeline_mode<synchronous>, transform_indices = @transform_1, window_bounds = array<i64: 1, 128>}, {pipeline_mode = #tpu.pipeline_mode<synchronous>, transform_indices = @transform_2, window_bounds = array<i64: 1, 128>}, {transform_indices = @transform_3, window_bounds = array<i64: 8, 128>}]} {
    %c0 = arith.constant 0 : index
    %c0_0 = arith.constant 0 : index
    %0 = vector.load %arg1[%c0, %c0_0] : memref<8x128xf32, #tpu.memory_space<vmem>>, vector<8x128xf32>
    %cst = arith.constant dense<0.000000e+00> : vector<8xf32>
    %1 = vector.multi_reduction <add>, %0, %cst [1] : vector<8x128xf32> to vector<8xf32>
    %2 = vector.shape_cast %1 : vector<8xf32> to vector<8x1xf32>
    %cst_1 = arith.constant 1.280000e+02 : f32
    %3 = vector.broadcast %cst_1 : f32 to vector<8x1xf32>
    %4 = arith.divf %2, %3 : vector<8x1xf32>
    %5 = vector.broadcast %4 : vector<8x1xf32> to vector<8x128xf32>
    %6 = arith.subf %0, %5 : vector<8x128xf32>
    %7 = arith.mulf %6, %6 : vector<8x128xf32>
    %cst_2 = arith.constant dense<0.000000e+00> : vector<8xf32>
    %8 = vector.multi_reduction <add>, %7, %cst_2 [1] : vector<8x128xf32> to vector<8xf32>
    %9 = vector.shape_cast %8 : vector<8xf32> to vector<8x1xf32>
    %cst_3 = arith.constant 1.270000e+02 : f32
    %10 = vector.broadcast %cst_3 : f32 to vector<8x1xf32>
    %11 = arith.divf %9, %10 : vector<8x1xf32>
    %12 = math.sqrt %11 : vector<8x1xf32>
    %cst_4 = arith.constant 9.99999997E-7 : f32
    %13 = vector.broadcast %cst_4 : f32 to vector<8x1xf32>
    %14 = arith.addf %12, %13 : vector<8x1xf32>
    %15 = tpu.reciprocal %14 : vector<8x1xf32> -> vector<8x1xf32>
    %16 = vector.broadcast %15 : vector<8x1xf32> to vector<8x128xf32>
    %17 = arith.mulf %6, %16 : vector<8x128xf32>
    %c0_5 = arith.constant 0 : index
    %c0_6 = arith.constant 0 : index
    %18 = vector.load %arg2[%c0_5, %c0_6] : memref<1x128xf32, #tpu.memory_space<vmem>>, vector<1x128xf32>
    %19 = vector.broadcast %18 : vector<1x128xf32> to vector<8x128xf32>
    %20 = arith.mulf %17, %19 : vector<8x128xf32>
    %c0_7 = arith.constant 0 : index
    %c0_8 = arith.constant 0 : index
    %21 = vector.load %arg3[%c0_7, %c0_8] : memref<1x128xf32, #tpu.memory_space<vmem>>, vector<1x128xf32>
    %22 = vector.broadcast %21 : vector<1x128xf32> to vector<8x128xf32>
    %23 = arith.addf %20, %22 : vector<8x128xf32>
    %c0_9 = arith.constant 0 : index
    %c0_10 = arith.constant 0 : index
    %24 = vector.load %arg4[%c0_9, %c0_10] : memref<8x128xf32, #tpu.memory_space<vmem>>, vector<8x128xf32>
    tpu.vector_store %arg4[%c0_9, %c0_10], %23 {strides = array<i32>} : memref<8x128xf32, #tpu.memory_space<vmem>>, vector<8x128xf32>,
    return
  }
  func.func @transform_0(%arg0: i32) -> (i32, i32) {
    %c0_i32 = arith.constant 0 : i32
    %c0_i32_0 = arith.constant 0 : i32
    return %arg0, %c0_i32 : i32, i32
  }
  func.func @transform_1(%arg0: i32) -> (i32, i32) {
    %c0_i32 = arith.constant 0 : i32
    %c0_i32_0 = arith.constant 0 : i32
    %c0_i32_1 = arith.constant 0 : i32
    return %c0_i32, %c0_i32_0 : i32, i32
  }
  func.func @transform_2(%arg0: i32) -> (i32, i32) {
    %c0_i32 = arith.constant 0 : i32
    %c0_i32_0 = arith.constant 0 : i32
    %c0_i32_1 = arith.constant 0 : i32
    return %c0_i32, %c0_i32_0 : i32, i32
  }
  func.func @transform_3(%arg0: i32) -> (i32, i32) {
    %c0_i32 = arith.constant 0 : i32
    %c0_i32_0 = arith.constant 0 : i32
    return %arg0, %c0_i32 : i32, i32
  }
}

</mosaic_0001>

<llo_original>
// kernel: tpu_custom_call.1
$region0: #{tpu_custom_call.1}
  #allocation0 [shape = 'u32[]', space=smem, size = 0x4, offset = 0x4, fixed_abs, tag = 'smem constant byte address 0x4 - core index']
  #allocation1 [shape = 'u32[72,128]{1,0:T(1,128)}', space=vmem, size = 0x9000, scoped, tag = 'internal scratch']
  %s0 = inlined_call_operand.hbm [shape: f32[16,128], index: 0, kind: input, shape index: {}]
  %s1 = inlined_call_operand.hbm [shape: f32[1,128], index: 1, kind: input, shape index: {}]
  %s2 = inlined_call_operand.vmem [shape: f32[1,128], index: 2, kind: input, shape index: {}]
  %s3 = inlined_call_operand.hbm [shape: f32[16,128], index: 3, kind: output, shape index: {}]
  %s4 = sld [smem:[#allocation0]]
  $region53: #{tpu_custom_call.1} parent=0
    _
  %s6 = ssub.s32 1, %s4
  %s7 = scalar_select 0, %s6, %s4
  $region1: #{tpu_custom_call.1} parent=0
    #allocation2 [shape = 'u8[8192]{0}', space=vmem, size = 0x2000, scoped, tag = 'input window, operand 0']
    #allocation3 [shape = 's32[2]{0}', space=sflag, size = 0x8, scoped, tag = 'scoped memory for tpu_custom_call.1']
    #allocation4 [shape = 's32[2]{0}', space=sflag, size = 0x8, scoped, tag = 'scoped memory for tpu_custom_call.1']
    #allocation5 [shape = 'u8[512]{0}', space=vmem, size = 0x400, scoped, tag = 'input window, operand 1, single buffered']
    #allocation6 [shape = 's32[1]{0}', space=sflag, size = 0x4, scoped, tag = 'scoped memory for tpu_custom_call.1']
    #allocation7 [shape = 'u8[8192]{0}', space=vmem, size = 0x2000, scoped, tag = 'output window, operand 0']
    %8 = vsyncpa [#allocation3], 0
    %s9 = scalar_lea.sflag [#allocation3], 1
    %10 = vsyncpa %s9, 0
    %11 = vsyncpa [#allocation6], 0
    %12 = vsyncpa [#allocation4], 0
    %s13 = scalar_lea.sflag [#allocation4], 1
    %14 = vsyncpa %s13, 0
    loop: start=0, step=1, limit=4
    $region2: #{tpu_custom_call.1} parent=1 // loop_pre_header
      _
    $region3: #{tpu_custom_call.1} parent=1 // loop_header
      %s16 = sphi 0, %s20
      %p17 = scmp.ge.s32.totalorder %s16, 4
      %s26 = sphi 0, %s28
      %s29 = sphi 0, %s26
      %s30 = sphi 0, %s29
      %s46 = sphi 0, %s30
      %s50 = sphi 0, %s50
      %s52 = sphi 0, %s50
      %s53 = sphi 0, %s52
      %s67 = sphi 0, %s53
      %s71 = sphi 0, %s71
      %s73 = sphi 0, %s71
      %s74 = sphi 0, %s73
      %s88 = sphi 0, %s74
      %s94 = sphi 0, %s96
      %s97 = sphi 0, %s94
      %s98 = sphi 0, %s97
      %s114 = sphi 0, %s98
    $region4: #{tpu_custom_call.1} parent=1 // loop_header_branch
      %19 = sbr.rel (%p17) target = $region8
    $region5: #{tpu_custom_call.1} parent=1 // loop_body
      %s21 = ssub.s32 %s16, 1
      %s22 = ssub.s32 %s16, 2
      %s23 = sadd.s32 %s16, 1
      %s24 = ssub.s32 %s16, %s23
      %p25 = scmp.eq.s32.totalorder %s24, 0
      %s27 = sadd.s32 %s26, 1
      %s28 = scalar_select %p25, %s26, %s27
      %p31 = pneg %p25
      %p32 = scmp.eq.s32.totalorder %s16, 1
      %p33 = por %p31, %p32
      %p34 = scmp.ne.s32.totalorder %s26, %s29
      %p35 = scmp.eq.s32.totalorder %s16, 0
      %p36 = por %p34, %p35
      %p37 = scmp.ne.s32.totalorder %s26, %s29
      %p38 = scmp.eq.s32.totalorder %s21, 1
      %p39 = por %p37, %p38
      %p40 = scmp.ne.s32.totalorder %s29, %s30
      %p41 = scmp.eq.s32.totalorder %s21, 0
      %p42 = por %p40, %p41
      %p43 = scmp.ne.s32.totalorder %s29, %s30
      %p44 = scmp.eq.s32.totalorder %s22, 1
      %p45 = por %p43, %p44
      %p47 = scmp.ne.s32.totalorder %s30, %s46
      %p48 = scmp.eq.s32.totalorder %s22, 0
      %p49 = por %p47, %p48
      %s51 = sadd.s32 %s50, 1
      %p54 = scmp.eq.s32.totalorder %s16, 1
      %p55 = scmp.ne.s32.totalorder %s50, %s52
      %p56 = scmp.eq.s32.totalorder %s16, 0
      %p57 = por %p55, %p56
      %p58 = scmp.ne.s32.totalorder %s50, %s52
      %p59 = scmp.eq.s32.totalorder %s21, 1
      %p60 = por %p58, %p59
      %p61 = scmp.ne.s32.totalorder %s52, %s53
      %p62 = scmp.eq.s32.totalorder %s21, 0
      %p63 = por %p61, %p62
      %p64 = scmp.ne.s32.totalorder %s52, %s53
      %p65 = scmp.eq.s32.totalorder %s22, 1
      %p66 = por %p64, %p65
      %p68 = scmp.ne.s32.totalorder %s53, %s67
      %p69 = scmp.eq.s32.totalorder %s22, 0
      %p70 = por %p68, %p69
      %s72 = sadd.s32 %s71, 1
      %p75 = scmp.eq.s32.totalorder %s16, 1
      %p76 = scmp.ne.s32.totalorder %s71, %s73
      %p77 = scmp.eq.s32.totalorder %s16, 0
      %p78 = por %p76, %p77
      %p79 = scmp.ne.s32.totalorder %s71, %s73
      %p80 = scmp.eq.s32.totalorder %s21, 1
      %p81 = por %p79, %p80
      %p82 = scmp.ne.s32.totalorder %s73, %s74
      %p83 = scmp.eq.s32.totalorder %s21, 0
      %p84 = por %p82, %p83
      %p85 = scmp.ne.s32.totalorder %s73, %s74
      %p86 = scmp.eq.s32.totalorder %s22, 1
      %p87 = por %p85, %p86
      %p89 = scmp.ne.s32.totalorder %s74, %s88
      %p90 = scmp.eq.s32.totalorder %s22, 0
      %p91 = por %p89, %p90
      %s92 = ssub.s32 %s16, %s23
      %p93 = scmp.eq.s32.totalorder %s92, 0
      %s95 = sadd.s32 %s94, 1
      %s96 = scalar_select %p93, %s94, %s95
      %p99 = pneg %p93
      %p100 = scmp.eq.s32.totalorder %s16, 1
      %p101 = por %p99, %p100
      %p102 = scmp.ne.s32.totalorder %s94, %s97
      %p103 = scmp.eq.s32.totalorder %s16, 0
      %p104 = por %p102, %p103
      %p105 = scmp.ne.s32.totalorder %s94, %s97
      %p106 = scmp.eq.s32.totalorder %s21, 1
      %p107 = por %p105, %p106
      %p108 = scmp.ne.s32.totalorder %s97, %s98
      %p109 = scmp.eq.s32.totalorder %s21, 0
      %p110 = por %p108, %p109
      %p111 = scmp.ne.s32.totalorder %s97, %s98
      %p112 = scmp.eq.s32.totalorder %s22, 1
      %p113 = por %p111, %p112
      %p115 = scmp.ne.s32.totalorder %s98, %s114
      %p116 = scmp.eq.s32.totalorder %s22, 0
      %p117 = por %p115, %p116
      %p118 = scmp.le.s32.totalorder 1, %s16
      %p119 = scmp.lt.s32.totalorder %s16, 3
      %p120 = pnand %p118, %p119
      %p121 = pneg %p120
      // Predicated region
      $region9: #{tpu_custom_call.1} parent=5 // pred_check
        _
      $region10: #{tpu_custom_call.1} parent=5 // pred_check_branch
        %123 = sbr.rel (%p120) target = $region12
      $region11: #{tpu_custom_call.1} parent=5 // pred_region
        %s124 = ssub.s32 %s16, 1
        // Predicated region
        $region13: #{tpu_custom_call.1} parent=11 // pred_check
          %p125 = pneg %p63
        $region14: #{tpu_custom_call.1} parent=11 // pred_check_branch
          %127 = sbr.rel (%p125) target = $region16
        $region15: #{tpu_custom_call.1} parent=11 // pred_region
          %129 = vsyncadd [#allocation6], 0
          %s131 = sshll.u32 %s1, 4
          %s132 = int_to_ptr.hbm [resolvable:$true] %s131
          %s133 = sshll.u32 [#allocation5], 4
          %s134 = int_to_ptr.vmem [resolvable:$true] %s133
          %136 = dma.hbm_to_vmem [thread:$0]  %s132, 16, %s134, [#allocation6]
        $region16: #{tpu_custom_call.1} parent=11 // pred_fallthru
          _
        // Predicated region
        $region17: #{tpu_custom_call.1} parent=11 // pred_check
          %p137 = pneg %p84
        $region18: #{tpu_custom_call.1} parent=11 // pred_check_branch
          %139 = sbr.rel (%p137) target = $region20
        $region19: #{tpu_custom_call.1} parent=11 // pred_region
          _
        $region20: #{tpu_custom_call.1} parent=11 // pred_fallthru
          _
      $region12: #{tpu_custom_call.1} parent=5 // pred_fallthru
        _
      %p140 = scmp.lt.s32.totalorder %s16, 2
      // Predicated region
      $region21: #{tpu_custom_call.1} parent=5 // pred_check
        %p141 = pneg %p140
      $region22: #{tpu_custom_call.1} parent=5 // pred_check_branch
        %143 = sbr.rel (%p141) target = $region24
      $region23: #{tpu_custom_call.1} parent=5 // pred_region
        // Predicated region
        $region25: #{tpu_custom_call.1} parent=23 // pred_check
          %p144 = pneg %p36
        $region26: #{tpu_custom_call.1} parent=23 // pred_check_branch
          %146 = sbr.rel (%p144) target = $region28
        $region27: #{tpu_custom_call.1} parent=23 // pred_region
          %s147 = sand.u32 %s26, 1
          %s148 = scalar_lea.sflag [#allocation3], %s147
          %s149 = sand.u32 %s26, 1
          %s150 = smul.addr %s149, 8
          %s151 = scalar_lea.vmem [#allocation2], %s150
          %153 = vsyncadd %s148, 0
          %s154 = smul.addr %s16, 8
          %s155 = scalar_lea.hbm %s0, %s154
          %s157 = sshll.u32 %s155, 4
          %s158 = int_to_ptr.hbm [resolvable:$true] %s157
          %s159 = sshll.u32 %s151, 4
          %s160 = int_to_ptr.vmem [resolvable:$true] %s159
          %162 = dma.hbm_to_vmem [thread:$0]  %s158, 128, %s160, %s148
        $region28: #{tpu_custom_call.1} parent=23 // pred_fallthru
          _
      $region24: #{tpu_custom_call.1} parent=5 // pred_fallthru
        _
      %p163 = scmp.le.s32.totalorder 1, %s16
      %p164 = scmp.lt.s32.totalorder %s16, 3
      %p165 = pnand %p163, %p164
      %p166 = pneg %p165
      // Predicated region
      $region29: #{tpu_custom_call.1} parent=5 // pred_check
        _
      $region30: #{tpu_custom_call.1} parent=5 // pred_check_branch
        %168 = sbr.rel (%p165) target = $region32
      $region31: #{tpu_custom_call.1} parent=5 // pred_region
        %s169 = ssub.s32 %s16, 1
        %s170 = sand.u32 %s29, 1
        %s171 = scalar_lea.sflag [#allocation3], %s170
        %s172 = sand.u32 %s29, 1
        %s173 = smul.addr %s172, 8
        %s174 = scalar_lea.vmem [#allocation2], %s173
        // Predicated region
        $region33: #{tpu_custom_call.1} parent=31 // pred_check
          %p175 = pneg %p42
        $region34: #{tpu_custom_call.1} parent=31 // pred_check_branch
          %177 = sbr.rel (%p175) target = $region36
        $region35: #{tpu_custom_call.1} parent=31 // pred_region
          %179 = dma.done %s171, 128
        $region36: #{tpu_custom_call.1} parent=31 // pred_fallthru
          _
        // Predicated region
        $region37: #{tpu_custom_call.1} parent=31 // pred_check
          %p180 = pneg %p63
        $region38: #{tpu_custom_call.1} parent=31 // pred_check_branch
          %182 = sbr.rel (%p180) target = $region40
        $region39: #{tpu_custom_call.1} parent=31 // pred_region
          %184 = dma.done [#allocation6], 16
        $region40: #{tpu_custom_call.1} parent=31 // pred_fallthru
          _
        %s185 = sand.u32 %s29, 1
        %s186 = scalar_lea.sflag [#allocation3], %s185
        %s187 = sand.u32 %s29, 1
        %s188 = smul.addr %s187, 8
        %s189 = scalar_lea.vmem [#allocation2], %s188
        %p190 = pneg %p42
        %p191 = pneg %p39
        %p192 = pneg %p63
        %p193 = pneg %p60
        %p194 = pneg %p84
        %p195 = pneg %p81
        %p196 = pneg %p110
        %p197 = pneg %p107
        %s198 = sand.u32 %s97, 1
        %s199 = scalar_lea.sflag [#allocation4], %s198
        %s200 = sand.u32 %s97, 1
        %s201 = smul.addr %s200, 8
        %s202 = scalar_lea.vmem [#allocation7], %s201
        %v203 = vld [vmem:[%s174] sm:$0xff]
        %204 = vadd.xlane.f32.xlu0 %v203
        %v205 = vpop.xlane.xlu0 %204
        %v206 = vrcp.pop 128.0
        %v207 = vmul.f32 128.0, %v206
        %v208 = vsub.f32 1.0, %v207
        %v209 = vmul.f32 %v206, %v208
        %v210 = vadd.f32 %v206, %v209
        %vm211 = vweird.f32 %v206
        %v212 = vsel %vm211, %v206, %v210
        %v213 = vmul.f32 %v205, %v212
        %v214 = vsub.f32 %v203, %v213
        %v215 = vmul.f32 %v214, %v214
        %216 = vadd.xlane.f32.xlu0 %v215
        %v217 = vpop.xlane.xlu0 %216
        %v218 = vrcp.pop 127.0
        %v219 = vmul.f32 127.0, %v218
        %v220 = vsub.f32 1.0, %v219
        %v221 = vmul.f32 %v218, %v220
        %v222 = vadd.f32 %v218, %v221
        %vm223 = vweird.f32 %v218
        %v224 = vsel %vm223, %v218, %v222
        %v225 = vmul.f32 %v217, %v224
        %v226 = vrsqrt.pop %v225
        %v227 = vmul.f32 %v226, %v225
        %v228 = vmul.f32 %v227, %v226
        %v229 = vmul.f32 0.5, %v228
        %v230 = vsub.f32 1.5, %v229
        %v231 = vmul.f32 %v226, %v230
        %v232 = vmul.f32 %v225, %v231
        %vm233 = vcmp.eq.f32.partialorder %v225, inf
        %v234 = vsel %vm233, %v225, %v232
        %vm235 = vcmp.eq.f32.partialorder %v225, 0.0
        %v236 = vand.u32 %v225, 2147483648
        %v237 = vsel %vm235, %v236, %v234
        %v238 = vadd.f32 %v237, 1e-06
        %v239 = vrcp.pop %v238
        %v240 = vmul.f32 %v238, %v239
        %v241 = vsub.f32 1.0, %v240
        %v242 = vmul.f32 %v239, %v241
        %v243 = vadd.f32 %v239, %v242
        %vm244 = vweird.f32 %v238
        %vm245 = vweird.f32 %v239
        %vm246 = vmor %vm244, %vm245
        %v247 = vsel %vm246, %v239, %v243
        %v248 = vand.u32 2147483647, %v238
        %vm249 = vcmp.eq.f32.partialorder %v248, 8.507059e+37
        %v250 = vand.u32 %v238, 2147483648
        %v251 = vor.u32 1.1754944e-38, %v250
        %v252 = vsel %vm249, %v251, %v247
        %v253 = vmul.f32 %v214, %v252
        %v254 = vld [vmem:[#allocation5] sm:$0x1]
        %v256 = vperm.slane %v254, 0
        %v258 = vmul.f32 %v253, %v256
        %v259 = vld [vmem:[%s2] sm:$0x1]
        %v261 = vperm.slane %v259, 0
        %v263 = vadd.f32 %v258, %v261
        %264 = vst [vmem:[%s202] sm:$0xff] %v263
        %s265 = sand.u32 %s97, 1
        %s266 = scalar_lea.sflag [#allocation4], %s265
        %s267 = sand.u32 %s97, 1
        %s268 = smul.addr %s267, 8
        %s269 = scalar_lea.vmem [#allocation7], %s268
        // Predicated region
        $region41: #{tpu_custom_call.1} parent=31 // pred_check
          %p270 = pneg %p107
        $region42: #{tpu_custom_call.1} parent=31 // pred_check_branch
          %272 = sbr.rel (%p270) target = $region44
        $region43: #{tpu_custom_call.1} parent=31 // pred_region
          %274 = vsyncadd %s266, 0
          %s275 = smul.addr %s21, 8
          %s276 = scalar_lea.hbm %s3, %s275
          %s278 = sshll.u32 %s269, 4
          %s279 = int_to_ptr.vmem [resolvable:$true] %s278
          %s280 = sshll.u32 %s276, 4
          %s281 = int_to_ptr.hbm [resolvable:$true] %s280
          %283 = dma.vmem_to_hbm [thread:$0]  %s279, 128, %s281, %s266
        $region44: #{tpu_custom_call.1} parent=31 // pred_fallthru
          _
      $region32: #{tpu_custom_call.1} parent=5 // pred_fallthru
        _
      %p284 = scmp.le.s32.totalorder 2, %s16
      // Predicated region
      $region45: #{tpu_custom_call.1} parent=5 // pred_check
        %p285 = pneg %p284
      $region46: #{tpu_custom_call.1} parent=5 // pred_check_branch
        %287 = sbr.rel (%p285) target = $region48
      $region47: #{tpu_custom_call.1} parent=5 // pred_region
        %s288 = ssub.s32 %s16, 2
        // Predicated region
        $region49: #{tpu_custom_call.1} parent=47 // pred_check
          %p289 = pneg %p113
        $region50: #{tpu_custom_call.1} parent=47 // pred_check_branch
          %291 = sbr.rel (%p289) target = $region52
        $region51: #{tpu_custom_call.1} parent=47 // pred_region
          %s292 = sand.u32 %s98, 1
          %s293 = scalar_lea.sflag [#allocation4], %s292
          %s294 = sand.u32 %s98, 1
          %s295 = smul.addr %s294, 8
          %s296 = scalar_lea.vmem [#allocation7], %s295
          %298 = dma.done %s293, 128
        $region52: #{tpu_custom_call.1} parent=47 // pred_fallthru
          _
      $region48: #{tpu_custom_call.1} parent=5 // pred_fallthru
        _
    $region6: #{tpu_custom_call.1} parent=1 // loop_footer
      %s20 = sadd.s32 1, %s16
    $region7: #{tpu_custom_call.1} parent=1 // loop_footer_branch
      %15 = sbr.rel target = $region3
    $region8: #{tpu_custom_call.1} parent=1 // loop_exit
      _
    %299 = vsyncpa [#allocation3], 1
    %s300 = scalar_lea.sflag [#allocation3], 1
    %301 = vsyncpa %s300, 1
    %302 = vsyncpa [#allocation6], 1
    %303 = vsyncpa [#allocation4], 1
    %s304 = scalar_lea.sflag [#allocation4], 1
    %305 = vsyncpa %s304, 1

</llo_original>
